<compile_context>
chip_gen: v6e
topology: v6e:2x2x1
jax: 0.10.0
libtpu: 0.0.40
codegen_flags: <defaults>
</compile_context>

<pallas_src>
import jax
import jax.numpy as jnp
from jax.experimental import pallas as pl
from jax.experimental.pallas import tpu as pltpu

LANES = 128
TARGET_BLOCK_BYTES = 2 * 1024 * 1024   # ~2 MiB per buffer: amortizes per-step overhead;
                                       # 2x(in)+2x(out) double-buffered blocks stay under
                                       # v5e's 16 MiB default scoped VMEM.
SMALL_INPUT_BYTES = 256 * 1024         # below this, a single-step grid is cheaper
                                       # (v5e/v6e grid is a serial loop).
MIN_ROW_STEPS = 4                      # >=4 (even) steps for large inputs: balanced work
                                       # across v7x's 2 TensorCores + real pipelining.


def _round_up(x: int, m: int) -> int:
    return ((x + m - 1) // m) * m


def _sublane_pack(dtype) -> int:
    # Native-tile sublane packing multiple: f32 -> 8, bf16/f16 -> 16, int8/fp8 -> 32.
    return max(8, 32 // jnp.dtype(dtype).itemsize)


def _good_loss_kernel(x_ref, o_ref):
    # Elementwise log1p(x^2 / 2). Square/scale on the VPU, log1p on the EUP
    # (separate bundle slot), so the kernel stays HBM-bound on v5e/v6e.
    # TODO(synk): on v7x (3.2 TB/s HBM/TC) the single EUP slot may become the
    # binding unit; if profiling shows that, compute log1p in bf16 for bf16 I/O.
    x = x_ref[...].astype(jnp.float32)
    o_ref[...] = jnp.log1p(x * x * 0.5).astype(o_ref.dtype)


def good_loss(ub_log_conf: jax.Array) -> jax.Array:
    """GOODLoss forward: log1p(x**2 / 2), as a Pallas TPU elementwise kernel."""
    x = ub_log_conf
    orig_shape = x.shape
    dtype = x.dtype

    if x.size == 0:
        return jnp.log1p(0.5 * x * x)

    itemsize = jnp.dtype(dtype).itemsize
    pack = _sublane_pack(dtype)

    # Layout-preserving collapse to 2-D (prod(leading), last_dim): no relayout
    # copy, unlike flattening to a (n//128, 128) slab.
    if x.ndim == 0:
        x2d = x.reshape(1, 1)
    elif x.ndim == 1:
        x2d = x.reshape(1, -1)
    else:
        x2d = x.reshape(-1, x.shape[-1])
    R, C = x2d.shape
    total_bytes = R * C * itemsize

    # Column blocking: keep the full last dim in the common case; only chunk it
    # in 128-lane multiples if a minimum-height block would otherwise be huge.
    if pack * C * itemsize <= 2 * TARGET_BLOCK_BYTES:
        block_cols = C
    else:
        block_cols = max(LANES, (TARGET_BLOCK_BYTES // (pack * itemsize)) // LANES * LANES)
    col_steps = pl.cdiv(C, block_cols)
    block_row_bytes = block_cols * itemsize

    # Row blocking: byte-based and dtype-aware (multiple of the sublane pack).
    if total_bytes <= SMALL_INPUT_BYTES or R <= pack:
        block_rows = R                       # full-extent block, single row step
    else:
        rows_target = max(pack, (TARGET_BLOCK_BYTES // block_row_bytes) // pack * pack)
        steps = max(MIN_ROW_STEPS, pl.cdiv(R, rows_target))
        steps += steps % 2                   # even step count -> balanced on v7x's 2 TCs
        block_rows = max(pack, _round_up(pl.cdiv(R, steps), pack))
        if block_rows >= R:
            block_rows = R
    grid = (pl.cdiv(R, block_rows), col_steps)

    n = R * C
    out2d = pl.pallas_call(
        _good_loss_kernel,
        out_shape=jax.ShapeDtypeStruct((R, C), dtype),
        grid=grid,
        in_specs=[pl.BlockSpec((block_rows, block_cols), lambda i, j: (i, j))],
        out_specs=pl.BlockSpec((block_rows, block_cols), lambda i, j: (i, j)),
        compiler_params=pltpu.CompilerParams(
            dimension_semantics=("parallel", "parallel"),
            vmem_limit_bytes=32 * 1024 * 1024,
        ),
        cost_estimate=pl.CostEstimate(
            flops=2 * n,
            transcendentals=n,
            bytes_accessed=2 * n * itemsize,
        ),
    )(x2d)

    return out2d.reshape(orig_shape)


if __name__ == "__main__":
    key = jax.random.PRNGKey(0)
    k0, k1, k2, k3 = jax.random.split(key, 4)

    # Small NCHW-like confidence tensor (matches the module's expected input).
    x = jax.random.normal(k0, (2, 4, 16, 16), dtype=jnp.float32)
    out = jax.block_until_ready(good_loss(x))
    ref = jnp.log1p(x * x * 0.5)
    assert out.shape == x.shape and out.dtype == x.dtype
    assert jnp.allclose(out, ref, atol=1e-5, rtol=1e-5)

    # Non-(8,128)-aligned shape: handled with full-extent blocks, no pad/slice copies.
    y = jax.random.normal(k1, (7, 37), dtype=jnp.float32)
    out_y = jax.block_until_ready(good_loss(y))
    assert jnp.allclose(out_y, jnp.log1p(y * y * 0.5), atol=1e-5, rtol=1e-5)

    # Larger f32 input: exercises the byte-based multi-step (>=4, even) row grid.
    z = jax.random.normal(k2, (1024, 384), dtype=jnp.float32)
    out_z = jax.block_until_ready(good_loss(z))
    assert jnp.allclose(out_z, jnp.log1p(z * z * 0.5), atol=1e-5, rtol=1e-5)

    # bf16 input: exercises dtype-aware (16-sublane) packing; f32 internal math.
    w = jax.random.normal(k3, (1024, 256), dtype=jnp.float32).astype(jnp.bfloat16)
    out_w = jax.block_until_ready(good_loss(w))
    wf = w.astype(jnp.float32)
    ref_w = jnp.log1p(wf * wf * 0.5).astype(jnp.bfloat16)
    assert out_w.dtype == jnp.bfloat16
    assert jnp.allclose(out_w.astype(jnp.float32), ref_w.astype(jnp.float32),
                        atol=2e-2, rtol=2e-2)

    print("KERNEL_OK")
</pallas_src>

<mosaic_0001>
module attributes {stable_mosaic.version = 11 : i64} {
  func.func @_good_loss_kernel(%arg0: i32, %arg1: i32, %arg2: memref<128x16xf32, #tpu.memory_space<vmem>>, %arg3: memref<128x16xf32, #tpu.memory_space<vmem>>) attributes {dimension_semantics = [#tpu.dimension_semantics<parallel>, #tpu.dimension_semantics<parallel>], iteration_bounds = array<i64: 1, 1>, scalar_prefetch = 0 : i64, scratch_operands = 0 : i64, tpu.core_type = #tpu.core_type<tc>, window_params = [{transform_indices = @transform_0, window_bounds = array<i64: 128, 16>}, {transform_indices = @transform_1, window_bounds = array<i64: 128, 16>}]} {
    %c0 = arith.constant 0 : index
    %c0_0 = arith.constant 0 : index
    %0 = vector.load %arg2[%c0, %c0_0] : memref<128x16xf32, #tpu.memory_space<vmem>>, vector<128x16xf32>
    %1 = arith.mulf %0, %0 : vector<128x16xf32>
    %cst = arith.constant 5.000000e-01 : f32
    %2 = vector.broadcast %cst : f32 to vector<128x16xf32>
    %3 = arith.mulf %1, %2 : vector<128x16xf32>
    %4 = math.log1p %3 : vector<128x16xf32>
    %c0_1 = arith.constant 0 : index
    %c0_2 = arith.constant 0 : index
    %5 = vector.load %arg3[%c0_1, %c0_2] : memref<128x16xf32, #tpu.memory_space<vmem>>, vector<128x16xf32>
    tpu.vector_store %arg3[%c0_1, %c0_2], %4 {strides = array<i32>} : memref<128x16xf32, #tpu.memory_space<vmem>>, vector<128x16xf32>,
    return
  }
  func.func @transform_0(%arg0: i32, %arg1: i32) -> (i32, i32) {
    %c0_i32 = arith.constant 0 : i32
    return %arg0, %arg1 : i32, i32
  }
  func.func @transform_1(%arg0: i32, %arg1: i32) -> (i32, i32) {
    %c0_i32 = arith.constant 0 : i32
    return %arg0, %arg1 : i32, i32
  }
}

</mosaic_0001>

<llo_original>
// kernel: tpu_custom_call.1
$region0: #{tpu_custom_call.1}
  #allocation0 [shape = 'u32[]', space=smem, size = 0x4, offset = 0x4, fixed_abs, tag = 'smem constant byte address 0x4 - core index']
  #allocation1 [shape = 'u32[144,128]{1,0:T(1,128)}', space=vmem, size = 0x12000, scoped, tag = 'internal scratch']
  %s0 = inlined_call_operand.vmem [shape: f32[128,16], index: 0, kind: input, shape index: {}]
  %s1 = inlined_call_operand.vmem [shape: f32[128,16], index: 1, kind: output, shape index: {}]
  %s2 = sld [smem:[#allocation0]]
  $region14: #{tpu_custom_call.1} parent=0
    _
  %s4 = ssub.s32 1, %s2
  %s5 = scalar_select 0, %s4, %s2
  // Predicated region
  $region2: #{tpu_custom_call.1} parent=0 // pred_check
    _
  $region3: #{tpu_custom_call.1} parent=0 // pred_check_branch
    %7 = sbr.rel (0) target = $region5
  $region4: #{tpu_custom_call.1} parent=0 // pred_region
    _
  $region5: #{tpu_custom_call.1} parent=0 // pred_fallthru
    _
  %v8 = vld [vmem:[%s0] sm:$0xff]
  %v9 = vld [vmem:[%s0 + $0x8] sm:$0xff]
  %v10 = vld [vmem:[%s0 + $0x10] sm:$0xff]
  %v11 = vld [vmem:[%s0 + $0x18] sm:$0xff]
  %v12 = vld [vmem:[%s0 + $0x20] sm:$0xff]
  %v13 = vld [vmem:[%s0 + $0x28] sm:$0xff]
  %v14 = vld [vmem:[%s0 + $0x30] sm:$0xff]
  %v15 = vld [vmem:[%s0 + $0x38] sm:$0xff]
  %v16 = vld [vmem:[%s0 + $0x40] sm:$0xff]
  %v17 = vld [vmem:[%s0 + $0x48] sm:$0xff]
  %v18 = vld [vmem:[%s0 + $0x50] sm:$0xff]
  %v19 = vld [vmem:[%s0 + $0x58] sm:$0xff]
  %v20 = vld [vmem:[%s0 + $0x60] sm:$0xff]
  %v21 = vld [vmem:[%s0 + $0x68] sm:$0xff]
  %v22 = vld [vmem:[%s0 + $0x70] sm:$0xff]
  %v23 = vld [vmem:[%s0 + $0x78] sm:$0xff]
  %v24 = vmul.f32 %v8, %v8
  %v25 = vmul.f32 %v9, %v9
  %v26 = vmul.f32 %v10, %v10
  %v27 = vmul.f32 %v11, %v11
  %v28 = vmul.f32 %v12, %v12
  %v29 = vmul.f32 %v13, %v13
  %v30 = vmul.f32 %v14, %v14
  %v31 = vmul.f32 %v15, %v15
  %v32 = vmul.f32 %v16, %v16
  %v33 = vmul.f32 %v17, %v17
  %v34 = vmul.f32 %v18, %v18
  %v35 = vmul.f32 %v19, %v19
  %v36 = vmul.f32 %v20, %v20
  %v37 = vmul.f32 %v21, %v21
  %v38 = vmul.f32 %v22, %v22
  %v39 = vmul.f32 %v23, %v23
  %v40 = vmul.f32 %v24, 0.5
  %v41 = vmul.f32 %v25, 0.5
  %v42 = vmul.f32 %v26, 0.5
  %v43 = vmul.f32 %v27, 0.5
  %v44 = vmul.f32 %v28, 0.5
  %v45 = vmul.f32 %v29, 0.5
  %v46 = vmul.f32 %v30, 0.5
  %v47 = vmul.f32 %v31, 0.5
  %v48 = vmul.f32 %v32, 0.5
  %v49 = vmul.f32 %v33, 0.5
  %v50 = vmul.f32 %v34, 0.5
  %v51 = vmul.f32 %v35, 0.5
  %v52 = vmul.f32 %v36, 0.5
  %v53 = vmul.f32 %v37, 0.5
  %v54 = vmul.f32 %v38, 0.5
  %v55 = vmul.f32 %v39, 0.5
  %v56 = vadd.f32 %v40, 1.0
  %v57 = vlog2.pop %v56
  %v58 = vmul.f32 %v57, 0.6931472
  %v59 = vmul.f32 -0.5, %v40
  %v60 = vadd.f32 %v59, 1.0
  %v61 = vmul.f32 %v60, %v40
  %v62 = vand.u32 2147483647, %v40
  %vm63 = vcmp.lt.f32.partialorder %v62, 0.0004427343
  %v64 = vsel %vm63, %v61, %v58
  %v65 = vadd.f32 %v41, 1.0
  %v66 = vlog2.pop %v65
  %v67 = vmul.f32 %v66, 0.6931472
  %v68 = vmul.f32 -0.5, %v41
  %v69 = vadd.f32 %v68, 1.0
  %v70 = vmul.f32 %v69, %v41
  %v71 = vand.u32 2147483647, %v41
  %vm72 = vcmp.lt.f32.partialorder %v71, 0.0004427343
  %v73 = vsel %vm72, %v70, %v67
  %v74 = vadd.f32 %v42, 1.0
  %v75 = vlog2.pop %v74
  %v76 = vmul.f32 %v75, 0.6931472
  %v77 = vmul.f32 -0.5, %v42
  %v78 = vadd.f32 %v77, 1.0
  %v79 = vmul.f32 %v78, %v42
  %v80 = vand.u32 2147483647, %v42
  %vm81 = vcmp.lt.f32.partialorder %v80, 0.0004427343
  %v82 = vsel %vm81, %v79, %v76
  %v83 = vadd.f32 %v43, 1.0
  %v84 = vlog2.pop %v83
  %v85 = vmul.f32 %v84, 0.6931472
  %v86 = vmul.f32 -0.5, %v43
  %v87 = vadd.f32 %v86, 1.0
  %v88 = vmul.f32 %v87, %v43
  %v89 = vand.u32 2147483647, %v43
  %vm90 = vcmp.lt.f32.partialorder %v89, 0.0004427343
  %v91 = vsel %vm90, %v88, %v85
  %v92 = vadd.f32 %v44, 1.0
  %v93 = vlog2.pop %v92
  %v94 = vmul.f32 %v93, 0.6931472
  %v95 = vmul.f32 -0.5, %v44
  %v96 = vadd.f32 %v95, 1.0
  %v97 = vmul.f32 %v96, %v44
  %v98 = vand.u32 2147483647, %v44
  %vm99 = vcmp.lt.f32.partialorder %v98, 0.0004427343
  %v100 = vsel %vm99, %v97, %v94
  %v101 = vadd.f32 %v45, 1.0
  %v102 = vlog2.pop %v101
  %v103 = vmul.f32 %v102, 0.6931472
  %v104 = vmul.f32 -0.5, %v45
  %v105 = vadd.f32 %v104, 1.0
  %v106 = vmul.f32 %v105, %v45
  %v107 = vand.u32 2147483647, %v45
  %vm108 = vcmp.lt.f32.partialorder %v107, 0.0004427343
  %v109 = vsel %vm108, %v106, %v103
  %v110 = vadd.f32 %v46, 1.0
  %v111 = vlog2.pop %v110
  %v112 = vmul.f32 %v111, 0.6931472
  %v113 = vmul.f32 -0.5, %v46
  %v114 = vadd.f32 %v113, 1.0
  %v115 = vmul.f32 %v114, %v46
  %v116 = vand.u32 2147483647, %v46
  %vm117 = vcmp.lt.f32.partialorder %v116, 0.0004427343
  %v118 = vsel %vm117, %v115, %v112
  %v119 = vadd.f32 %v47, 1.0
  %v120 = vlog2.pop %v119
  %v121 = vmul.f32 %v120, 0.6931472
  %v122 = vmul.f32 -0.5, %v47
  %v123 = vadd.f32 %v122, 1.0
  %v124 = vmul.f32 %v123, %v47
  %v125 = vand.u32 2147483647, %v47
  %vm126 = vcmp.lt.f32.partialorder %v125, 0.0004427343
  %v127 = vsel %vm126, %v124, %v121
  %v128 = vadd.f32 %v48, 1.0
  %v129 = vlog2.pop %v128
  %v130 = vmul.f32 %v129, 0.6931472
  %v131 = vmul.f32 -0.5, %v48
  %v132 = vadd.f32 %v131, 1.0
  %v133 = vmul.f32 %v132, %v48
  %v134 = vand.u32 2147483647, %v48
  %vm135 = vcmp.lt.f32.partialorder %v134, 0.0004427343
  %v136 = vsel %vm135, %v133, %v130
  %v137 = vadd.f32 %v49, 1.0
  %v138 = vlog2.pop %v137
  %v139 = vmul.f32 %v138, 0.6931472
  %v140 = vmul.f32 -0.5, %v49
  %v141 = vadd.f32 %v140, 1.0
  %v142 = vmul.f32 %v141, %v49
  %v143 = vand.u32 2147483647, %v49
  %vm144 = vcmp.lt.f32.partialorder %v143, 0.0004427343
  %v145 = vsel %vm144, %v142, %v139
  %v146 = vadd.f32 %v50, 1.0
  %v147 = vlog2.pop %v146
  %v148 = vmul.f32 %v147, 0.6931472
  %v149 = vmul.f32 -0.5, %v50
  %v150 = vadd.f32 %v149, 1.0
  %v151 = vmul.f32 %v150, %v50
  %v152 = vand.u32 2147483647, %v50
  %vm153 = vcmp.lt.f32.partialorder %v152, 0.0004427343
  %v154 = vsel %vm153, %v151, %v148
  %v155 = vadd.f32 %v51, 1.0
  %v156 = vlog2.pop %v155
  %v157 = vmul.f32 %v156, 0.6931472
  %v158 = vmul.f32 -0.5, %v51
  %v159 = vadd.f32 %v158, 1.0
  %v160 = vmul.f32 %v159, %v51
  %v161 = vand.u32 2147483647, %v51
  %vm162 = vcmp.lt.f32.partialorder %v161, 0.0004427343
  %v163 = vsel %vm162, %v160, %v157
  %v164 = vadd.f32 %v52, 1.0
  %v165 = vlog2.pop %v164
  %v166 = vmul.f32 %v165, 0.6931472
  %v167 = vmul.f32 -0.5, %v52
  %v168 = vadd.f32 %v167, 1.0
  %v169 = vmul.f32 %v168, %v52
  %v170 = vand.u32 2147483647, %v52
  %vm171 = vcmp.lt.f32.partialorder %v170, 0.0004427343
  %v172 = vsel %vm171, %v169, %v166
  %v173 = vadd.f32 %v53, 1.0
  %v174 = vlog2.pop %v173
  %v175 = vmul.f32 %v174, 0.6931472
  %v176 = vmul.f32 -0.5, %v53
  %v177 = vadd.f32 %v176, 1.0
  %v178 = vmul.f32 %v177, %v53
  %v179 = vand.u32 2147483647, %v53
  %vm180 = vcmp.lt.f32.partialorder %v179, 0.0004427343
  %v181 = vsel %vm180, %v178, %v175
  %v182 = vadd.f32 %v54, 1.0
  %v183 = vlog2.pop %v182
  %v184 = vmul.f32 %v183, 0.6931472
  %v185 = vmul.f32 -0.5, %v54
  %v186 = vadd.f32 %v185, 1.0
  %v187 = vmul.f32 %v186, %v54
  %v188 = vand.u32 2147483647, %v54
  %vm189 = vcmp.lt.f32.partialorder %v188, 0.0004427343
  %v190 = vsel %vm189, %v187, %v184
  %v191 = vadd.f32 %v55, 1.0
  %v192 = vlog2.pop %v191
  %v193 = vmul.f32 %v192, 0.6931472
  %v194 = vmul.f32 -0.5, %v55
  %v195 = vadd.f32 %v194, 1.0
  %v196 = vmul.f32 %v195, %v55
  %v197 = vand.u32 2147483647, %v55
  %vm198 = vcmp.lt.f32.partialorder %v197, 0.0004427343
  %v199 = vsel %vm198, %v196, %v193
  %vm200 = vcmask 130048
  %201 = vst.msk [vmem:[%s1] sm:$0xff] %vm200, %v64
  %202 = vst.msk [vmem:[%s1 + $0x8] sm:$0xff] %vm200, %v73
  %203 = vst.msk [vmem:[%s1 + $0x10] sm:$0xff] %vm200, %v82
  %204 = vst.msk [vmem:[%s1 + $0x18] sm:$0xff] %vm200, %v91
  %205 = vst.msk [vmem:[%s1 + $0x20] sm:$0xff] %vm200, %v100
  %206 = vst.msk [vmem:[%s1 + $0x28] sm:$0xff] %vm200, %v109
  %207 = vst.msk [vmem:[%s1 + $0x30] sm:$0xff] %vm200, %v118
  %208 = vst.msk [vmem:[%s1 + $0x38] sm:$0xff] %vm200, %v127
  %209 = vst.msk [vmem:[%s1 + $0x40] sm:$0xff] %vm200, %v136
  %210 = vst.msk [vmem:[%s1 + $0x48] sm:$0xff] %vm200, %v145
  %211 = vst.msk [vmem:[%s1 + $0x50] sm:$0xff] %vm200, %v154
  %212 = vst.msk [vmem:[%s1 + $0x58] sm:$0xff] %vm200, %v163
  %213 = vst.msk [vmem:[%s1 + $0x60] sm:$0xff] %vm200, %v172
  %214 = vst.msk [vmem:[%s1 + $0x68] sm:$0xff] %vm200, %v181
  %215 = vst.msk [vmem:[%s1 + $0x70] sm:$0xff] %vm200, %v190
  %216 = vst.msk [vmem:[%s1 + $0x78] sm:$0xff] %vm200, %v199
  // Predicated region
  $region6: #{tpu_custom_call.1} parent=0 // pred_check
    _
  $region7: #{tpu_custom_call.1} parent=0 // pred_check_branch
    %218 = sbr.rel (0) target = $region9
  $region8: #{tpu_custom_call.1} parent=0 // pred_region
    _
  $region9: #{tpu_custom_call.1} parent=0 // pred_fallthru
    _
  // Predicated region
  $region10: #{tpu_custom_call.1} parent=0 // pred_check
    _
  $region11: #{tpu_custom_call.1} parent=0 // pred_check_branch
    %220 = sbr.rel (0) target = $region13
  $region12: #{tpu_custom_call.1} parent=0 // pred_region
    _
  $region13: #{tpu_custom_call.1} parent=0 // pred_fallthru
    _

</llo_original>
